<compile_context>
chip_gen: v7x
topology: tpu7x:2x2x1
jax: 0.10.0
libtpu: 0.0.40
codegen_flags: <defaults>
</compile_context>

<pallas_src>
import functools

import jax
import jax.numpy as jnp
from jax.experimental import pallas as pl
from jax.experimental.pallas import tpu as pltpu


def _round_up(x, m):
    return (x + m - 1) // m * m


def _triplet_row_kernel(xi_ref, xall_ref, sqc_ref, sqr_ref, tc_ref, tr_ref,
                        out_ref, *, margin, n_real, n_pad, use_bf16_gram):
    xi = xi_ref[...]                                     # (tile_n, d_pad) f32
    xa = xall_ref[...]                                   # (n_pad, d_pad) f32
    if use_bf16_gram:
        # Optional v6e/v7x throughput knob (bf16 MXU); norms + accumulation
        # stay in f32. Off by default to match the f32 reference exactly.
        xi = xi.astype(jnp.bfloat16)
        xa = xa.astype(jnp.bfloat16)

    # Gram strip on the MXU: contract the feature (last) dims of both operands
    # -- no explicit transpose of x is ever materialized.
    gram = jax.lax.dot_general(
        xi, xa, dimension_numbers=(((1,), (1,)), ((), ())),
        preferred_element_type=jnp.float32)              # (tile_n, n_pad)

    # Pairwise squared distances for this row block: ||a||^2 + ||b||^2 - 2ab.
    dist2 = sqc_ref[...] + sqr_ref[...] - 2.0 * gram     # (tile_n, n_pad)

    # Same/different-class masks from (tile_n,1) vs (1,n_pad) label layouts.
    same = tc_ref[...] == tr_ref[...]
    diff = jnp.logical_not(same)
    if n_pad != n_real:  # static: mask out zero-padded columns
        col_valid = jax.lax.broadcasted_iota(jnp.int32, (1, n_pad), 1) < n_real
        same = jnp.logical_and(same, col_valid)
        diff = jnp.logical_and(diff, col_valid)

    big = jnp.float32(1e30)
    # Batch-hard mining on squared distances (sqrt and the clamp are monotone,
    # so the winners are identical); only 2*tile_n sqrts instead of tile_n*n_pad.
    dap2 = jnp.max(jnp.where(same, dist2, -big), axis=1, keepdims=True)
    dan2 = jnp.min(jnp.where(diff, dist2, big), axis=1, keepdims=True)
    dist_ap = jnp.sqrt(jnp.maximum(dap2, 1e-12))
    dist_an = jnp.sqrt(jnp.maximum(dan2, 1e-12))

    # MarginRankingLoss with y = 1: max(0, margin + d_ap - d_an) per row.
    out_ref[...] = jnp.maximum(margin + dist_ap - dist_an, 0.0)


def ori_triplet_loss(inputs, targets, margin=0.3, *, tile_n=256,
                     use_bf16_gram=False):
    """inputs: (n, d) float features; targets: (n,) integer labels."""
    n, d = inputs.shape

    # Pad the feature dim to a multiple of 128 (lane / MXU-K alignment); zero
    # padding does not change dot products or squared norms.
    d_pad = _round_up(max(d, 1), 128)
    # Row tiling: single block for small n, otherwise `tile_n`-row strips.
    if n <= tile_n:
        tn = _round_up(n, 8)
        n_pad = tn
    else:
        tn = tile_n
        n_pad = _round_up(n, tn)
    num_blocks = n_pad // tn

    x = inputs.astype(jnp.float32)
    x = jnp.pad(x, ((0, n_pad - n), (0, d_pad - d)))
    t = jnp.pad(targets.astype(jnp.int32), (0, n_pad - n), constant_values=-1)
    sq = jnp.sum(x * x, axis=1)                          # (n_pad,)

    kernel = functools.partial(
        _triplet_row_kernel, margin=float(margin), n_real=n, n_pad=n_pad,
        use_bf16_gram=use_bf16_gram)

    per_row = pl.pallas_call(
        kernel,
        out_shape=jax.ShapeDtypeStruct((n_pad, 1), jnp.float32),
        grid_spec=pltpu.PrefetchScalarGridSpec(
            num_scalar_prefetch=0,
            grid=(num_blocks,),
            in_specs=[
                pl.BlockSpec((tn, d_pad), lambda i: (i, 0)),     # row block of x
                pl.BlockSpec((n_pad, d_pad), lambda i: (0, 0)),  # full x (resident)
                pl.BlockSpec((tn, 1), lambda i: (i, 0)),         # ||x||^2 column block
                pl.BlockSpec((1, n_pad), lambda i: (0, 0)),      # ||x||^2 lane-dense row
                pl.BlockSpec((tn, 1), lambda i: (i, 0)),         # labels column block
                pl.BlockSpec((1, n_pad), lambda i: (0, 0)),      # labels lane-dense row
            ],
            out_specs=pl.BlockSpec((tn, 1), lambda i: (i, 0)),
        ),
        compiler_params=pltpu.CompilerParams(
            dimension_semantics=("parallel",)),
    )(x, x, sq.reshape(n_pad, 1), sq.reshape(1, n_pad),
      t.reshape(n_pad, 1), t.reshape(1, n_pad))

    # Mean over the real rows (padded rows are sliced away).
    return jnp.sum(per_row[:n, 0]) / jnp.float32(n)


def _reference(inputs, targets, margin=0.3):
    # Pure-JAX reference mirroring the PyTorch module.
    sq = jnp.sum(inputs**2, axis=1, keepdims=True)
    dist = jnp.sqrt(jnp.maximum(sq + sq.T - 2.0 * inputs @ inputs.T, 1e-12))
    mask = targets[:, None] == targets[None, :]
    dist_ap = jnp.max(jnp.where(mask, dist, -jnp.inf), axis=1)
    dist_an = jnp.min(jnp.where(mask, jnp.inf, dist), axis=1)
    return jnp.mean(jnp.maximum(margin + dist_ap - dist_an, 0.0))


if __name__ == "__main__":
    key = jax.random.PRNGKey(0)
    n, d = 8, 32
    x = jax.random.normal(key, (n, d), dtype=jnp.float32)
    # 4 classes, 2 samples each -> every row has a positive and a negative.
    targets = jnp.array([0, 0, 1, 1, 2, 2, 3, 3], dtype=jnp.int32)

    loss = ori_triplet_loss(x, targets, margin=0.3)
    jax.block_until_ready(loss)

    ref = _reference(x, targets, margin=0.3)
    assert jnp.allclose(loss, ref, rtol=1e-5, atol=1e-5), (loss, ref)

    print("KERNEL_OK")
</pallas_src>

<mosaic_0001>
module attributes {stable_mosaic.version = 11 : i64} {
  func.func @_triplet_row_kernel(%arg0: i32, %arg1: memref<8x128xf32, #tpu.memory_space<vmem>>, %arg2: memref<8x128xf32, #tpu.memory_space<vmem>>, %arg3: memref<8x1xf32, #tpu.memory_space<vmem>>, %arg4: memref<1x8xf32, #tpu.memory_space<vmem>>, %arg5: memref<8x1xi32, #tpu.memory_space<vmem>>, %arg6: memref<1x8xi32, #tpu.memory_space<vmem>>, %arg7: memref<8x1xf32, #tpu.memory_space<vmem>>) attributes {dimension_semantics = [#tpu.dimension_semantics<parallel>], iteration_bounds = array<i64: 1>, scalar_prefetch = 0 : i64, scratch_operands = 0 : i64, tpu.core_type = #tpu.core_type<tc>, window_params = [{transform_indices = @transform_0, window_bounds = array<i64: 8, 128>}, {pipeline_mode = #tpu.pipeline_mode<synchronous>, transform_indices = @transform_1, window_bounds = array<i64: 8, 128>}, {transform_indices = @transform_2, window_bounds = array<i64: 8, 1>}, {pipeline_mode = #tpu.pipeline_mode<synchronous>, transform_indices = @transform_3, window_bounds = array<i64: 1, 8>}, {transform_indices = @transform_4, window_bounds = array<i64: 8, 1>}, {pipeline_mode = #tpu.pipeline_mode<synchronous>, transform_indices = @transform_5, window_bounds = array<i64: 1, 8>}, {transform_indices = @transform_6, window_bounds = array<i64: 8, 1>}]} {
    %c0 = arith.constant 0 : index
    %c0_0 = arith.constant 0 : index
    %0 = vector.load %arg1[%c0, %c0_0] : memref<8x128xf32, #tpu.memory_space<vmem>>, vector<8x128xf32>
    %c0_1 = arith.constant 0 : index
    %c0_2 = arith.constant 0 : index
    %1 = vector.load %arg2[%c0_1, %c0_2] : memref<8x128xf32, #tpu.memory_space<vmem>>, vector<8x128xf32>
    %cst = arith.constant dense<0.000000e+00> : vector<8x8xf32>
    %2 = tpu.matmul %0, %1, %cst {dimension_numbers = #tpu.dot_dimension_numbers<[1], [1], [0], [0], [0, 0, 1, 0], [], []>} : vector<8x128xf32>, vector<8x128xf32>, vector<8x8xf32> -> vector<8x8xf32>
    %c0_3 = arith.constant 0 : index
    %c0_4 = arith.constant 0 : index
    %3 = vector.load %arg3[%c0_3, %c0_4] : memref<8x1xf32, #tpu.memory_space<vmem>>, vector<8x1xf32>
    %c0_5 = arith.constant 0 : index
    %c0_6 = arith.constant 0 : index
    %4 = vector.load %arg4[%c0_5, %c0_6] : memref<1x8xf32, #tpu.memory_space<vmem>>, vector<1x8xf32>
    %5 = vector.broadcast %3 : vector<8x1xf32> to vector<8x8xf32>
    %6 = vector.broadcast %4 : vector<1x8xf32> to vector<8x8xf32>
    %7 = arith.addf %5, %6 : vector<8x8xf32>
    %cst_7 = arith.constant 2.000000e+00 : f32
    %8 = vector.broadcast %cst_7 : f32 to vector<8x8xf32>
    %9 = arith.mulf %8, %2 : vector<8x8xf32>
    %10 = arith.subf %7, %9 : vector<8x8xf32>
    %c0_8 = arith.constant 0 : index
    %c0_9 = arith.constant 0 : index
    %11 = vector.load %arg5[%c0_8, %c0_9] : memref<8x1xi32, #tpu.memory_space<vmem>>, vector<8x1xi32>
    %c0_10 = arith.constant 0 : index
    %c0_11 = arith.constant 0 : index
    %12 = vector.load %arg6[%c0_10, %c0_11] : memref<1x8xi32, #tpu.memory_space<vmem>>, vector<1x8xi32>
    %13 = vector.broadcast %11 : vector<8x1xi32> to vector<8x8xi32>
    %14 = vector.broadcast %12 : vector<1x8xi32> to vector<8x8xi32>
    %15 = arith.cmpi eq, %13, %14 : vector<8x8xi32>
    %cst_12 = arith.constant dense<true> : vector<8x8xi1>
    %16 = arith.xori %15, %cst_12 : vector<8x8xi1>
    %cst_13 = arith.constant 0.000000e+00 : f32
    %cst_14 = arith.constant 1.000000e+30 : f32
    %17 = arith.subf %cst_13, %cst_14 : f32
    %18 = vector.broadcast %17 : f32 to vector<8x8xf32>
    %19 = arith.select %15, %10, %18 : vector<8x8xi1>, vector<8x8xf32>
    %cst_15 = arith.constant dense<0xFF800000> : vector<8xf32>
    %20 = vector.multi_reduction <maximumf>, %19, %cst_15 [1] : vector<8x8xf32> to vector<8xf32>
    %21 = vector.shape_cast %20 : vector<8xf32> to vector<8x1xf32>
    %cst_16 = arith.constant 1.000000e+30 : f32
    %22 = vector.broadcast %cst_16 : f32 to vector<8x8xf32>
    %23 = arith.select %16, %10, %22 : vector<8x8xi1>, vector<8x8xf32>
    %cst_17 = arith.constant dense<0x7F800000> : vector<8xf32>
    %24 = vector.multi_reduction <minimumf>, %23, %cst_17 [1] : vector<8x8xf32> to vector<8xf32>
    %25 = vector.shape_cast %24 : vector<8xf32> to vector<8x1xf32>
    %cst_18 = arith.constant 9.99999996E-13 : f32
    %26 = vector.broadcast %cst_18 : f32 to vector<8x1xf32>
    %27 = arith.maximumf %21, %26 : vector<8x1xf32>
    %28 = math.sqrt %27 : vector<8x1xf32>
    %cst_19 = arith.constant 9.99999996E-13 : f32
    %29 = vector.broadcast %cst_19 : f32 to vector<8x1xf32>
    %30 = arith.maximumf %25, %29 : vector<8x1xf32>
    %31 = math.sqrt %30 : vector<8x1xf32>
    %cst_20 = arith.constant 3.000000e-01 : f32
    %32 = vector.broadcast %cst_20 : f32 to vector<8x1xf32>
    %33 = arith.addf %32, %28 : vector<8x1xf32>
    %34 = arith.subf %33, %31 : vector<8x1xf32>
    %cst_21 = arith.constant 0.000000e+00 : f32
    %35 = vector.broadcast %cst_21 : f32 to vector<8x1xf32>
    %36 = arith.maximumf %34, %35 : vector<8x1xf32>
    %c0_22 = arith.constant 0 : index
    %c0_23 = arith.constant 0 : index
    %37 = vector.load %arg7[%c0_22, %c0_23] : memref<8x1xf32, #tpu.memory_space<vmem>>, vector<8x1xf32>
    tpu.vector_store %arg7[%c0_22, %c0_23], %36 {strides = array<i32>} : memref<8x1xf32, #tpu.memory_space<vmem>>, vector<8x1xf32>,
    return
  }
  func.func @transform_0(%arg0: i32) -> (i32, i32) {
    %c0_i32 = arith.constant 0 : i32
    %c0_i32_0 = arith.constant 0 : i32
    return %arg0, %c0_i32 : i32, i32
  }
  func.func @transform_1(%arg0: i32) -> (i32, i32) {
    %c0_i32 = arith.constant 0 : i32
    %c0_i32_0 = arith.constant 0 : i32
    %c0_i32_1 = arith.constant 0 : i32
    return %c0_i32, %c0_i32_0 : i32, i32
  }
  func.func @transform_2(%arg0: i32) -> (i32, i32) {
    %c0_i32 = arith.constant 0 : i32
    %c0_i32_0 = arith.constant 0 : i32
    return %arg0, %c0_i32 : i32, i32
  }
  func.func @transform_3(%arg0: i32) -> (i32, i32) {
    %c0_i32 = arith.constant 0 : i32
    %c0_i32_0 = arith.constant 0 : i32
    %c0_i32_1 = arith.constant 0 : i32
    return %c0_i32, %c0_i32_0 : i32, i32
  }
  func.func @transform_4(%arg0: i32) -> (i32, i32) {
    %c0_i32 = arith.constant 0 : i32
    %c0_i32_0 = arith.constant 0 : i32
    return %arg0, %c0_i32 : i32, i32
  }
  func.func @transform_5(%arg0: i32) -> (i32, i32) {
    %c0_i32 = arith.constant 0 : i32
    %c0_i32_0 = arith.constant 0 : i32
    %c0_i32_1 = arith.constant 0 : i32
    return %c0_i32, %c0_i32_0 : i32, i32
  }
  func.func @transform_6(%arg0: i32) -> (i32, i32) {
    %c0_i32 = arith.constant 0 : i32
    %c0_i32_0 = arith.constant 0 : i32
    return %arg0, %c0_i32 : i32, i32
  }
}

</mosaic_0001>

<llo_original>
// kernel: tpu_custom_call.1
$region0: #{tpu_custom_call.1}
  #allocation0 [shape = 'u32[]', space=smem, size = 0x4, offset = 0x4, fixed_abs, tag = 'smem constant byte address 0x4 - core index']
  #allocation1 [shape = 'u32[144,128]{1,0:T(1,128)}', space=vmem, size = 0x12000, scoped, tag = 'internal scratch']
  %s0 = inlined_call_operand.vmem [shape: f32[8,128], index: 0, kind: input, shape index: {}]
  %s1 = inlined_call_operand.vmem [shape: f32[8,128], index: 1, kind: input, shape index: {}]
  %s2 = inlined_call_operand.vmem [shape: f32[8,1], index: 2, kind: input, shape index: {}]
  %s3 = inlined_call_operand.vmem [shape: f32[1,8], index: 3, kind: input, shape index: {}]
  %s4 = inlined_call_operand.vmem [shape: s32[8,1], index: 4, kind: input, shape index: {}]
  %s5 = inlined_call_operand.vmem [shape: s32[1,8], index: 5, kind: input, shape index: {}]
  %s6 = inlined_call_operand.vmem [shape: f32[8,1], index: 6, kind: output, shape index: {}]
  %s7 = sld [smem:[#allocation0]]
  $region34: #{tpu_custom_call.1} parent=0
    _
  %s9 = ssub.s32 1, %s7
  %s10 = scalar_select 0, %s9, %s7
  // Predicated region
  $region2: #{tpu_custom_call.1} parent=0 // pred_check
    _
  $region3: #{tpu_custom_call.1} parent=0 // pred_check_branch
    %12 = sbr.rel (0) target = $region5
  $region4: #{tpu_custom_call.1} parent=0 // pred_region
    _
  $region5: #{tpu_custom_call.1} parent=0 // pred_fallthru
    _
  // Predicated region
  $region6: #{tpu_custom_call.1} parent=0 // pred_check
    _
  $region7: #{tpu_custom_call.1} parent=0 // pred_check_branch
    %14 = sbr.rel (0) target = $region9
  $region8: #{tpu_custom_call.1} parent=0 // pred_region
    _
  $region9: #{tpu_custom_call.1} parent=0 // pred_fallthru
    _
  // Predicated region
  $region10: #{tpu_custom_call.1} parent=0 // pred_check
    _
  $region11: #{tpu_custom_call.1} parent=0 // pred_check_branch
    %16 = sbr.rel (0) target = $region13
  $region12: #{tpu_custom_call.1} parent=0 // pred_region
    _
  $region13: #{tpu_custom_call.1} parent=0 // pred_fallthru
    _
  // Predicated region
  $region14: #{tpu_custom_call.1} parent=0 // pred_check
    _
  $region15: #{tpu_custom_call.1} parent=0 // pred_check_branch
    %18 = sbr.rel (0) target = $region17
  $region16: #{tpu_custom_call.1} parent=0 // pred_region
    _
  $region17: #{tpu_custom_call.1} parent=0 // pred_fallthru
    _
  // Predicated region
  $region18: #{tpu_custom_call.1} parent=0 // pred_check
    _
  $region19: #{tpu_custom_call.1} parent=0 // pred_check_branch
    %20 = sbr.rel (0) target = $region21
  $region20: #{tpu_custom_call.1} parent=0 // pred_region
    _
  $region21: #{tpu_custom_call.1} parent=0 // pred_fallthru
    _
  // Predicated region
  $region22: #{tpu_custom_call.1} parent=0 // pred_check
    _
  $region23: #{tpu_custom_call.1} parent=0 // pred_check_branch
    %22 = sbr.rel (0) target = $region25
  $region24: #{tpu_custom_call.1} parent=0 // pred_region
    _
  $region25: #{tpu_custom_call.1} parent=0 // pred_fallthru
    _
  %v23 = vld [vmem:[%s0] sm:$0xff]
  %v24 = vld [vmem:[%s1] sm:$0xff]
  %25 = vmatprep.subr.mxu0 0.0
  %26 = vmatpush1.xpose.msra.mxu0 %v24
  %27 = vmatprep.subr.mxu0 0.0
  %28 = vmatpush1.xpose.msra.mxu0 0.0
  %29 = vmatprep.subr.mxu0 0.0
  %30 = vmatpush1.xpose.msra.mxu0 0.0
  %31 = vmatprep.subr.mxu0 0.0
  %32 = vmatpush1.xpose.msra.mxu0 0.0
  %33 = vmatprep.subr.mxu0 0.0
  %34 = vmatpush1.xpose.msra.mxu0 0.0
  %35 = vmatprep.subr.mxu0 0.0
  %36 = vmatpush1.xpose.msra.mxu0 0.0
  %37 = vmatprep.subr.mxu0 0.0
  %38 = vmatpush1.xpose.msra.mxu0 0.0
  %39 = vmatprep.subr.mxu0 0.0
  %40 = vmatpush1.xpose.msra.mxu0 0.0
  %41 = vmatprep.subr.mxu0 0.0
  %42 = vmatpush1.xpose.msra.mxu0 0.0
  %43 = vmatprep.subr.mxu0 0.0
  %44 = vmatpush1.xpose.msra.mxu0 0.0
  %45 = vmatprep.subr.mxu0 0.0
  %46 = vmatpush1.xpose.msra.mxu0 0.0
  %47 = vmatprep.subr.mxu0 0.0
  %48 = vmatpush1.xpose.msra.mxu0 0.0
  %49 = vmatprep.subr.mxu0 0.0
  %50 = vmatpush1.xpose.msra.mxu0 0.0
  %51 = vmatprep.subr.mxu0 0.0
  %52 = vmatpush1.xpose.msra.mxu0 0.0
  %53 = vmatprep.subr.mxu0 0.0
  %54 = vmatpush1.xpose.msra.mxu0 0.0
  %55 = vmatprep.subr.mxu0 0.0
  %56 = vmatpush1.xpose.msra.mxu0 0.0
  %57 = vmatprep.subr.mxu0 0.0
  %58 = vmatpush1.xpose.msra.mxu0 0.0
  %59 = vmatprep.subr.mxu0 0.0
  %60 = vmatpush1.xpose.msra.mxu0 0.0
  %61 = vmatprep.subr.mxu0 0.0
  %62 = vmatpush1.xpose.msra.mxu0 0.0
  %63 = vmatprep.subr.mxu0 0.0
  %64 = vmatpush1.xpose.msra.mxu0 0.0
  %65 = vmatprep.subr.mxu0 0.0
  %66 = vmatpush1.xpose.msra.mxu0 0.0
  %67 = vmatprep.subr.mxu0 0.0
  %68 = vmatpush1.xpose.msra.mxu0 0.0
  %69 = vmatprep.subr.mxu0 0.0
  %70 = vmatpush1.xpose.msra.mxu0 0.0
  %71 = vmatprep.subr.mxu0 0.0
  %72 = vmatpush1.xpose.msra.mxu0 0.0
  %73 = vmatprep.subr.mxu0 0.0
  %74 = vmatpush1.xpose.msra.mxu0 0.0
  %75 = vmatprep.subr.mxu0 0.0
  %76 = vmatpush1.xpose.msra.mxu0 0.0
  %77 = vmatprep.subr.mxu0 0.0
  %78 = vmatpush1.xpose.msra.mxu0 0.0
  %79 = vmatprep.subr.mxu0 0.0
  %80 = vmatpush1.xpose.msra.mxu0 0.0
  %81 = vmatprep.subr.mxu0 0.0
  %82 = vmatpush1.xpose.msra.mxu0 0.0
  %83 = vmatprep.subr.mxu0 0.0
  %84 = vmatpush1.xpose.msra.mxu0 0.0
  %85 = vmatprep.subr.mxu0 0.0
  %86 = vmatpush1.xpose.msra.mxu0 0.0
  %87 = vmatprep.subr.mxu0 0.0
  %88 = vmatpush1.xpose.msra.mxu0 0.0
  %89 = vmatprep.mubr.f32.mxu0 0.0
  %90 = vmatmul.mubr.f32.gmra.mrb[0].mxu0 %v23
  %v91 = vpop.f32.mrb[0].mxu0
  %v92 = vadd.f32 0.0, %v91
  %v93 = vpop.f32.mrb[0].mxu0
  %94 = vdwg.mxu0
  %v95 = vld [vmem:[%s2] sm:$0xff]
  %v96 = vld [vmem:[%s3] sm:$0x1]
  %98 = vset.pattern.permute.xlu0 0
  %99 = vperm.xlu0 %98, %v95
  %v100 = vpop.permute.xlu0 %99
  %v103 = vlaneseq
  %v104 = vshrl.u32 %v103, 7
  %v105 = vsub.s32 0, %v104
  %v106 = vrot.slane %v96, %v105
  %v108 = vadd.f32 %v100, %v106
  %v109 = vmul.f32 %v92, 2.0
  %v110 = vsub.f32 %v108, %v109
  %v111 = vld [vmem:[%s4] sm:$0xff]
  %v112 = vld [vmem:[%s5] sm:$0x1]
  %113 = vset.pattern.permute.xlu0 0
  %114 = vperm.xlu0 %113, %v111
  %v115 = vpop.permute.xlu0 %114
  %v116 = vlaneseq
  %v117 = vshrl.u32 %v116, 7
  %v118 = vsub.s32 0, %v117
  %v119 = vrot.slane %v112, %v118
  %vm120 = vcmp.eq.s32.totalorder %v115, %v119
  %vm121 = vmxor %vm120, 1
  %v122 = vsel %vm120, %v110, -1e+30
  %vm123 = vcmask 64512
  %v124 = vsel %vm123, %v122, -inf
  %125 = vmax.xlane.f32.xlu0 %v124
  %v126 = vpop.xlane.xlu0 %125
  %v127 = vsel %vm121, %v110, 1e+30
  %v128 = vsel %vm123, %v127, inf
  %129 = vmin.xlane.f32.xlu0 %v128
  %v130 = vpop.xlane.xlu0 %129
  %v131 = vmax.f32 %v126, 1e-12
  %v132 = vrsqrt.pop %v131
  %v133 = vmul.f32 %v131, %v132
  %vm134 = vcmp.eq.f32.partialorder %v131, inf
  %v135 = vsel %vm134, %v131, %v133
  %vm136 = vcmp.eq.f32.partialorder %v131, 0.0
  %v137 = vand.u32 %v131, 2147483648
  %v138 = vsel %vm136, %v137, %v135
  %v139 = vmax.f32 %v130, 1e-12
  %v140 = vrsqrt.pop %v139
  %v141 = vmul.f32 %v139, %v140
  %vm142 = vcmp.eq.f32.partialorder %v139, inf
  %v143 = vsel %vm142, %v139, %v141
  %vm144 = vcmp.eq.f32.partialorder %v139, 0.0
  %v145 = vand.u32 %v139, 2147483648
  %v146 = vsel %vm144, %v145, %v143
  %v147 = vadd.f32 %v138, 0.3
  %v148 = vsub.f32 %v147, %v146
  %v149 = vmax.f32 %v148, 0.0
  %vm150 = vcmask 7168
  %151 = vst.msk [vmem:[%s6] sm:$0xff] %vm150, %v149
  // Predicated region
  $region26: #{tpu_custom_call.1} parent=0 // pred_check
    _
  $region27: #{tpu_custom_call.1} parent=0 // pred_check_branch
    %153 = sbr.rel (0) target = $region29
  $region28: #{tpu_custom_call.1} parent=0 // pred_region
    _
  $region29: #{tpu_custom_call.1} parent=0 // pred_fallthru
    _
  // Predicated region
  $region30: #{tpu_custom_call.1} parent=0 // pred_check
    _
  $region31: #{tpu_custom_call.1} parent=0 // pred_check_branch
    %155 = sbr.rel (0) target = $region33
  $region32: #{tpu_custom_call.1} parent=0 // pred_region
    _
  $region33: #{tpu_custom_call.1} parent=0 // pred_fallthru
    _

</llo_original>
